<compile_context>
chip_gen: v7x
topology: tpu7x:2x2x1
jax: 0.10.0
libtpu: 0.0.40
codegen_flags: <defaults>
</compile_context>

<pallas_src>
import functools

import jax
import jax.numpy as jnp
from jax.experimental import pallas as pl
from jax.experimental.pallas import tpu as pltpu


def _round_up(x, m):
    return ((x + m - 1) // m) * m


def mlp_kernel(xT_ref,
               w1_ref, b1_ref,
               w2_ref, b2_ref,
               w3_ref, b3_ref,
               w45_ref, b45_ref,
               o_ref):
    """One batch tile, feature-major: h = W @ h + b, (relu) x3, fused (lin4;lin5)."""
    h = xT_ref[...]                                   # (in_dim, tile_b)

    h = jnp.dot(w1_ref[...], h, preferred_element_type=jnp.float32) + b1_ref[...]
    h = jnp.maximum(h, 0.0)                           # (64, tile_b)

    h = jnp.dot(w2_ref[...], h, preferred_element_type=jnp.float32) + b2_ref[...]
    h = jnp.maximum(h, 0.0)                           # (32, tile_b)

    h = jnp.dot(w3_ref[...], h, preferred_element_type=jnp.float32) + b3_ref[...]
    h = jnp.maximum(h, 0.0)                           # (16, tile_b)

    # Fused linear4 @ linear5 (no activation between them in the reference).
    h = jnp.dot(w45_ref[...], h, preferred_element_type=jnp.float32) + b45_ref[...]

    o_ref[...] = h.astype(o_ref.dtype)                # (out_dim, tile_b), lane-dense


@functools.partial(jax.jit, static_argnames=("tile_b",))
def mlp_forward(x, params, *, tile_b=2048):
    """x: [B, input_dim] float32. params: list of 5 (W, b), W:(out,in), b:(out,1)."""
    B, in_dim = x.shape
    (w1, b1), (w2, b2), (w3, b3), (w4, b4), (w5, b5) = params

    # Algebraic fusion of the two trailing linear layers (done once in the
    # wrapper; XLA hoists it as a tiny constant-like computation):
    #   y = W5 (W4 h + b4) + b5 = (W5 W4) h + (W5 b4 + b5)
    w45 = jnp.dot(w5, w4, preferred_element_type=jnp.float32)        # (out_dim, 16)
    b45 = jnp.dot(w5, b4, preferred_element_type=jnp.float32) + b5   # (out_dim, 1)
    out_dim = w45.shape[0]

    fused = [(w1, b1), (w2, b2), (w3, b3), (w45, b45)]

    # Batch tiling: lane axis must be a multiple of 128.  Small B collapses to
    # a single tile; large B uses tile_b-wide tiles (grid >= 2 -> megacore).
    eff_tile = min(_round_up(tile_b, 128), _round_up(B, 128))
    b_padded = _round_up(B, eff_tile)
    if b_padded != B:
        x = jnp.pad(x, ((0, b_padded - B), (0, 0)))
    xT = x.T                                          # (in_dim, b_padded)
    grid = (b_padded // eff_tile,)

    # xT / out stream per grid step; weights & biases are full-array blocks with
    # constant index_maps, so they are fetched once and stay VMEM-resident.
    in_specs = [pl.BlockSpec((in_dim, eff_tile), lambda i: (0, i))]
    flat = []
    for W, b in fused:
        in_specs.append(pl.BlockSpec(W.shape, lambda i: (0, 0)))
        in_specs.append(pl.BlockSpec(b.shape, lambda i: (0, 0)))
        flat.extend([W, b])
    out_spec = pl.BlockSpec((out_dim, eff_tile), lambda i: (0, i))

    out = pl.pallas_call(
        mlp_kernel,
        out_shape=jax.ShapeDtypeStruct((out_dim, b_padded), jnp.float32),
        grid=grid,
        in_specs=in_specs,
        out_specs=out_spec,
        compiler_params=pltpu.CompilerParams(
            # Independent batch tiles -> megacore-shardable on v7x when grid>=2.
            dimension_semantics=("parallel",),
            # ~1.5 MiB/tile double-buffered; explicit limit lifts default caps
            # while staying far under even v7x's 64 MiB physical VMEM.
            vmem_limit_bytes=32 * 1024 * 1024,
        ),
    )(xT, *flat)

    return out[:, :B].T                               # (B, out_dim)


def init_params(key, input_dim, output_dim):
    """PyTorch-native layout: W (out_features, in_features), b (out_features, 1)."""
    dims = [input_dim, 64, 32, 16, 16, output_dim]
    params = []
    for i in range(5):
        fan_in, fan_out = dims[i], dims[i + 1]
        key, kw, kb = jax.random.split(key, 3)
        bound = 1.0 / jnp.sqrt(jnp.float32(fan_in))
        # PyTorch Linear default init: U(-1/sqrt(fan_in), 1/sqrt(fan_in))
        W = jax.random.uniform(kw, (fan_out, fan_in), jnp.float32, -bound, bound)
        b = jax.random.uniform(kb, (fan_out, 1), jnp.float32, -bound, bound)
        params.append((W, b))
    return params


def reference_forward(x, params):
    """Unfused reference matching the PyTorch forward (eval mode)."""
    h = x
    for i, (W, b) in enumerate(params):
        h = h @ W.T + b[:, 0]
        if i < 3:
            h = jnp.maximum(h, 0.0)
    return h


if __name__ == "__main__":
    key = jax.random.PRNGKey(0)
    input_dim = 8    # California housing has 8 features
    output_dim = 1

    k_x1, k_x2, k_p = jax.random.split(key, 3)
    params = init_params(k_p, input_dim, output_dim)

    # Multi-tile case (exercises the batch grid + ragged padding path).
    batch_big = 300
    x_big = jax.random.normal(k_x1, (batch_big, input_dim), jnp.float32)
    out_big = jax.block_until_ready(mlp_forward(x_big, params, tile_b=128))
    ref_big = reference_forward(x_big, params)
    assert out_big.shape == (batch_big, output_dim)
    assert jnp.allclose(out_big, ref_big, atol=1e-4, rtol=1e-4), "mismatch (big batch)"

    # Tiny-batch case (single padded tile), matching the original usage.
    batch_small = 8
    x_small = jax.random.normal(k_x2, (batch_small, input_dim), jnp.float32)
    out_small = jax.block_until_ready(mlp_forward(x_small, params))
    ref_small = reference_forward(x_small, params)
    assert out_small.shape == (batch_small, output_dim)
    assert jnp.allclose(out_small, ref_small, atol=1e-4, rtol=1e-4), "mismatch (small batch)"

    print("KERNEL_OK")
</pallas_src>

<mosaic_0001>
module attributes {stable_mosaic.version = 11 : i64} {
  func.func @mlp_kernel(%arg0: i32, %arg1: memref<8x128xf32, #tpu.memory_space<vmem>>, %arg2: memref<64x8xf32, #tpu.memory_space<vmem>>, %arg3: memref<64x1xf32, #tpu.memory_space<vmem>>, %arg4: memref<32x64xf32, #tpu.memory_space<vmem>>, %arg5: memref<32x1xf32, #tpu.memory_space<vmem>>, %arg6: memref<16x32xf32, #tpu.memory_space<vmem>>, %arg7: memref<16x1xf32, #tpu.memory_space<vmem>>, %arg8: memref<1x16xf32, #tpu.memory_space<vmem>>, %arg9: memref<1x1xf32, #tpu.memory_space<vmem>>, %arg10: memref<1x128xf32, #tpu.memory_space<vmem>>) attributes {dimension_semantics = [#tpu.dimension_semantics<parallel>], iteration_bounds = array<i64: 3>, scalar_prefetch = 0 : i64, scratch_operands = 0 : i64, tpu.core_type = #tpu.core_type<tc>, window_params = [{transform_indices = @transform_0, window_bounds = array<i64: 8, 128>}, {pipeline_mode = #tpu.pipeline_mode<synchronous>, transform_indices = @transform_1, window_bounds = array<i64: 64, 8>}, {pipeline_mode = #tpu.pipeline_mode<synchronous>, transform_indices = @transform_2, window_bounds = array<i64: 64, 1>}, {pipeline_mode = #tpu.pipeline_mode<synchronous>, transform_indices = @transform_3, window_bounds = array<i64: 32, 64>}, {pipeline_mode = #tpu.pipeline_mode<synchronous>, transform_indices = @transform_4, window_bounds = array<i64: 32, 1>}, {pipeline_mode = #tpu.pipeline_mode<synchronous>, transform_indices = @transform_5, window_bounds = array<i64: 16, 32>}, {pipeline_mode = #tpu.pipeline_mode<synchronous>, transform_indices = @transform_6, window_bounds = array<i64: 16, 1>}, {pipeline_mode = #tpu.pipeline_mode<synchronous>, transform_indices = @transform_7, window_bounds = array<i64: 1, 16>}, {pipeline_mode = #tpu.pipeline_mode<synchronous>, transform_indices = @transform_8, window_bounds = array<i64: 1, 1>}, {transform_indices = @transform_9, window_bounds = array<i64: 1, 128>}]} {
    %c0 = arith.constant 0 : index
    %c0_0 = arith.constant 0 : index
    %0 = vector.load %arg1[%c0, %c0_0] : memref<8x128xf32, #tpu.memory_space<vmem>>, vector<8x128xf32>
    %c0_1 = arith.constant 0 : index
    %c0_2 = arith.constant 0 : index
    %1 = vector.load %arg2[%c0_1, %c0_2] : memref<64x8xf32, #tpu.memory_space<vmem>>, vector<64x8xf32>
    %cst = arith.constant dense<0.000000e+00> : vector<64x128xf32>
    %2 = tpu.matmul %1, %0, %cst {dimension_numbers = #tpu.dot_dimension_numbers<[1], [0], [0], [1], [0, 0, 1, 1], [], []>} : vector<64x8xf32>, vector<8x128xf32>, vector<64x128xf32> -> vector<64x128xf32>
    %c0_3 = arith.constant 0 : index
    %c0_4 = arith.constant 0 : index
    %3 = vector.load %arg3[%c0_3, %c0_4] : memref<64x1xf32, #tpu.memory_space<vmem>>, vector<64x1xf32>
    %4 = vector.broadcast %3 : vector<64x1xf32> to vector<64x128xf32>
    %5 = arith.addf %2, %4 : vector<64x128xf32>
    %cst_5 = arith.constant 0.000000e+00 : f32
    %6 = vector.broadcast %cst_5 : f32 to vector<64x128xf32>
    %7 = arith.maximumf %5, %6 : vector<64x128xf32>
    %c0_6 = arith.constant 0 : index
    %c0_7 = arith.constant 0 : index
    %8 = vector.load %arg4[%c0_6, %c0_7] : memref<32x64xf32, #tpu.memory_space<vmem>>, vector<32x64xf32>
    %cst_8 = arith.constant dense<0.000000e+00> : vector<32x128xf32>
    %9 = tpu.matmul %8, %7, %cst_8 {dimension_numbers = #tpu.dot_dimension_numbers<[1], [0], [0], [1], [0, 0, 1, 1], [], []>} : vector<32x64xf32>, vector<64x128xf32>, vector<32x128xf32> -> vector<32x128xf32>
    %c0_9 = arith.constant 0 : index
    %c0_10 = arith.constant 0 : index
    %10 = vector.load %arg5[%c0_9, %c0_10] : memref<32x1xf32, #tpu.memory_space<vmem>>, vector<32x1xf32>
    %11 = vector.broadcast %10 : vector<32x1xf32> to vector<32x128xf32>
    %12 = arith.addf %9, %11 : vector<32x128xf32>
    %cst_11 = arith.constant 0.000000e+00 : f32
    %13 = vector.broadcast %cst_11 : f32 to vector<32x128xf32>
    %14 = arith.maximumf %12, %13 : vector<32x128xf32>
    %c0_12 = arith.constant 0 : index
    %c0_13 = arith.constant 0 : index
    %15 = vector.load %arg6[%c0_12, %c0_13] : memref<16x32xf32, #tpu.memory_space<vmem>>, vector<16x32xf32>
    %cst_14 = arith.constant dense<0.000000e+00> : vector<16x128xf32>
    %16 = tpu.matmul %15, %14, %cst_14 {dimension_numbers = #tpu.dot_dimension_numbers<[1], [0], [0], [1], [0, 0, 1, 1], [], []>} : vector<16x32xf32>, vector<32x128xf32>, vector<16x128xf32> -> vector<16x128xf32>
    %c0_15 = arith.constant 0 : index
    %c0_16 = arith.constant 0 : index
    %17 = vector.load %arg7[%c0_15, %c0_16] : memref<16x1xf32, #tpu.memory_space<vmem>>, vector<16x1xf32>
    %18 = vector.broadcast %17 : vector<16x1xf32> to vector<16x128xf32>
    %19 = arith.addf %16, %18 : vector<16x128xf32>
    %cst_17 = arith.constant 0.000000e+00 : f32
    %20 = vector.broadcast %cst_17 : f32 to vector<16x128xf32>
    %21 = arith.maximumf %19, %20 : vector<16x128xf32>
    %c0_18 = arith.constant 0 : index
    %c0_19 = arith.constant 0 : index
    %22 = vector.load %arg8[%c0_18, %c0_19] : memref<1x16xf32, #tpu.memory_space<vmem>>, vector<1x16xf32>
    %cst_20 = arith.constant dense<0.000000e+00> : vector<1x128xf32>
    %23 = tpu.matmul %22, %21, %cst_20 {dimension_numbers = #tpu.dot_dimension_numbers<[1], [0], [0], [1], [0, 0, 1, 1], [], []>} : vector<1x16xf32>, vector<16x128xf32>, vector<1x128xf32> -> vector<1x128xf32>
    %c0_21 = arith.constant 0 : index
    %c0_22 = arith.constant 0 : index
    %24 = vector.load %arg9[%c0_21, %c0_22] : memref<1x1xf32, #tpu.memory_space<vmem>>, vector<1x1xf32>
    %25 = vector.broadcast %24 : vector<1x1xf32> to vector<1x128xf32>
    %26 = arith.addf %23, %25 : vector<1x128xf32>
    %c0_23 = arith.constant 0 : index
    %c0_24 = arith.constant 0 : index
    %27 = vector.load %arg10[%c0_23, %c0_24] : memref<1x128xf32, #tpu.memory_space<vmem>>, vector<1x128xf32>
    tpu.vector_store %arg10[%c0_23, %c0_24], %26 {strides = array<i32>} : memref<1x128xf32, #tpu.memory_space<vmem>>, vector<1x128xf32>,
    return
  }
  func.func @transform_0(%arg0: i32) -> (i32, i32) {
    %c0_i32 = arith.constant 0 : i32
    %c0_i32_0 = arith.constant 0 : i32
    return %c0_i32, %arg0 : i32, i32
  }
  func.func @transform_1(%arg0: i32) -> (i32, i32) {
    %c0_i32 = arith.constant 0 : i32
    %c0_i32_0 = arith.constant 0 : i32
    %c0_i32_1 = arith.constant 0 : i32
    return %c0_i32, %c0_i32_0 : i32, i32
  }
  func.func @transform_2(%arg0: i32) -> (i32, i32) {
    %c0_i32 = arith.constant 0 : i32
    %c0_i32_0 = arith.constant 0 : i32
    %c0_i32_1 = arith.constant 0 : i32
    return %c0_i32, %c0_i32_0 : i32, i32
  }
  func.func @transform_3(%arg0: i32) -> (i32, i32) {
    %c0_i32 = arith.constant 0 : i32
    %c0_i32_0 = arith.constant 0 : i32
    %c0_i32_1 = arith.constant 0 : i32
    return %c0_i32, %c0_i32_0 : i32, i32
  }
  func.func @transform_4(%arg0: i32) -> (i32, i32) {
    %c0_i32 = arith.constant 0 : i32
    %c0_i32_0 = arith.constant 0 : i32
    %c0_i32_1 = arith.constant 0 : i32
    return %c0_i32, %c0_i32_0 : i32, i32
  }
  func.func @transform_5(%arg0: i32) -> (i32, i32) {
    %c0_i32 = arith.constant 0 : i32
    %c0_i32_0 = arith.constant 0 : i32
    %c0_i32_1 = arith.constant 0 : i32
    return %c0_i32, %c0_i32_0 : i32, i32
  }
  func.func @transform_6(%arg0: i32) -> (i32, i32) {
    %c0_i32 = arith.constant 0 : i32
    %c0_i32_0 = arith.constant 0 : i32
    %c0_i32_1 = arith.constant 0 : i32
    return %c0_i32, %c0_i32_0 : i32, i32
  }
  func.func @transform_7(%arg0: i32) -> (i32, i32) {
    %c0_i32 = arith.constant 0 : i32
    %c0_i32_0 = arith.constant 0 : i32
    %c0_i32_1 = arith.constant 0 : i32
    return %c0_i32, %c0_i32_0 : i32, i32
  }
  func.func @transform_8(%arg0: i32) -> (i32, i32) {
    %c0_i32 = arith.constant 0 : i32
    %c0_i32_0 = arith.constant 0 : i32
    %c0_i32_1 = arith.constant 0 : i32
    return %c0_i32, %c0_i32_0 : i32, i32
  }
  func.func @transform_9(%arg0: i32) -> (i32, i32) {
    %c0_i32 = arith.constant 0 : i32
    %c0_i32_0 = arith.constant 0 : i32
    return %c0_i32, %arg0 : i32, i32
  }
}

</mosaic_0001>

<llo_original>
// kernel: mlp_forward.1
$region0: #{mlp_forward.1}
  #allocation0 [shape = 'u32[]', space=smem, size = 0x4, offset = 0x4, fixed_abs, tag = 'smem constant byte address 0x4 - core index']
  #allocation1 [shape = 'u32[144,128]{1,0:T(1,128)}', space=vmem, size = 0x12000, scoped, tag = 'internal scratch']
  #allocation2 [shape = 'f32[1,1]{1,0:T(1,128)S(1)}', space=vmem, size = 0x200, scoped, tag = 'scoped memory for mlp_forward.1']
  %s0 = inlined_call_operand.vmem [shape: f32[8,384], index: 0, kind: input, shape index: {}]
  %s1 = inlined_call_operand.vmem [shape: f32[64,8], index: 1, kind: input, shape index: {}]
  %s2 = inlined_call_operand.vmem [shape: f32[64,1], index: 2, kind: input, shape index: {}]
  %s3 = inlined_call_operand.vmem [shape: f32[32,64], index: 3, kind: input, shape index: {}]
  %s4 = inlined_call_operand.vmem [shape: f32[32,1], index: 4, kind: input, shape index: {}]
  %s5 = inlined_call_operand.vmem [shape: f32[16,32], index: 5, kind: input, shape index: {}]
  %s6 = inlined_call_operand.vmem [shape: f32[16,1], index: 6, kind: input, shape index: {}]
  %s7 = inlined_call_operand.vmem [shape: f32[1,16], index: 7, kind: input, shape index: {}]
  %s8 = inlined_call_operand.<no memory space> [shape: f32[1,1], index: 8, kind: input, shape index: {}]
  %s9 = inlined_call_operand.vmem [shape: f32[1,384], index: 9, kind: output, shape index: {}]
  %s10 = sld [smem:[#allocation0]]
  $region69: #{mlp_forward.1} parent=0
    _
  %s12 = ssub.s32 1, %s10
  %s13 = scalar_select 0, %s12, %s10
  %v14 = vstv %s8
  %15 = vst [vmem:[#allocation2] sm:$0x1] %v14
  loop: start=0, step=1, limit=5
  $region2: #{mlp_forward.1} parent=0 // loop_pre_header
    _
  $region3: #{mlp_forward.1} parent=0 // loop_header
    %s17 = sphi 0, %s21
    %p18 = scmp.ge.s32.totalorder %s17, 5
    %s27 = sphi 0, %s29
    %s30 = sphi 0, %s27
    %s31 = sphi 0, %s30
    %s47 = sphi 0, %s31
    %s51 = sphi 0, %s51
    %s53 = sphi 0, %s51
    %s54 = sphi 0, %s53
    %s68 = sphi 0, %s54
    %s72 = sphi 0, %s72
    %s74 = sphi 0, %s72
    %s75 = sphi 0, %s74
    %s89 = sphi 0, %s75
    %s93 = sphi 0, %s93
    %s95 = sphi 0, %s93
    %s96 = sphi 0, %s95
    %s110 = sphi 0, %s96
    %s114 = sphi 0, %s114
    %s116 = sphi 0, %s114
    %s117 = sphi 0, %s116
    %s131 = sphi 0, %s117
    %s135 = sphi 0, %s135
    %s137 = sphi 0, %s135
    %s138 = sphi 0, %s137
    %s152 = sphi 0, %s138
    %s156 = sphi 0, %s156
    %s158 = sphi 0, %s156
    %s159 = sphi 0, %s158
    %s173 = sphi 0, %s159
    %s177 = sphi 0, %s177
    %s179 = sphi 0, %s177
    %s180 = sphi 0, %s179
    %s194 = sphi 0, %s180
    %s198 = sphi 0, %s198
    %s200 = sphi 0, %s198
    %s201 = sphi 0, %s200
    %s215 = sphi 0, %s201
    %s221 = sphi 0, %s223
    %s224 = sphi 0, %s221
    %s225 = sphi 0, %s224
    %s241 = sphi 0, %s225
  $region4: #{mlp_forward.1} parent=0 // loop_header_branch
    %20 = sbr.rel (%p18) target = $region8
  $region5: #{mlp_forward.1} parent=0 // loop_body
    %s22 = ssub.s32 %s17, 1
    %s23 = ssub.s32 %s17, 2
    %s24 = sadd.s32 %s17, 1
    %s25 = ssub.s32 %s17, %s24
    %p26 = scmp.eq.s32.totalorder %s25, 0
    %s28 = sadd.s32 %s27, 1
    %s29 = scalar_select %p26, %s27, %s28
    %p32 = pneg %p26
    %p33 = scmp.eq.s32.totalorder %s17, 2
    %p34 = por %p32, %p33
    %p35 = scmp.ne.s32.totalorder %s27, %s30
    %p36 = scmp.eq.s32.totalorder %s17, 0
    %p37 = por %p35, %p36
    %p38 = scmp.ne.s32.totalorder %s27, %s30
    %p39 = scmp.eq.s32.totalorder %s22, 2
    %p40 = por %p38, %p39
    %p41 = scmp.ne.s32.totalorder %s30, %s31
    %p42 = scmp.eq.s32.totalorder %s22, 0
    %p43 = por %p41, %p42
    %p44 = scmp.ne.s32.totalorder %s30, %s31
    %p45 = scmp.eq.s32.totalorder %s23, 2
    %p46 = por %p44, %p45
    %p48 = scmp.ne.s32.totalorder %s31, %s47
    %p49 = scmp.eq.s32.totalorder %s23, 0
    %p50 = por %p48, %p49
    %s52 = sadd.s32 %s51, 1
    %p55 = scmp.eq.s32.totalorder %s17, 2
    %p56 = scmp.ne.s32.totalorder %s51, %s53
    %p57 = scmp.eq.s32.totalorder %s17, 0
    %p58 = por %p56, %p57
    %p59 = scmp.ne.s32.totalorder %s51, %s53
    %p60 = scmp.eq.s32.totalorder %s22, 2
    %p61 = por %p59, %p60
    %p62 = scmp.ne.s32.totalorder %s53, %s54
    %p63 = scmp.eq.s32.totalorder %s22, 0
    %p64 = por %p62, %p63
    %p65 = scmp.ne.s32.totalorder %s53, %s54
    %p66 = scmp.eq.s32.totalorder %s23, 2
    %p67 = por %p65, %p66
    %p69 = scmp.ne.s32.totalorder %s54, %s68
    %p70 = scmp.eq.s32.totalorder %s23, 0
    %p71 = por %p69, %p70
    %s73 = sadd.s32 %s72, 1
    %p76 = scmp.eq.s32.totalorder %s17, 2
    %p77 = scmp.ne.s32.totalorder %s72, %s74
    %p78 = scmp.eq.s32.totalorder %s17, 0
    %p79 = por %p77, %p78
    %p80 = scmp.ne.s32.totalorder %s72, %s74
    %p81 = scmp.eq.s32.totalorder %s22, 2
    %p82 = por %p80, %p81
    %p83 = scmp.ne.s32.totalorder %s74, %s75
    %p84 = scmp.eq.s32.totalorder %s22, 0
    %p85 = por %p83, %p84
    %p86 = scmp.ne.s32.totalorder %s74, %s75
    %p87 = scmp.eq.s32.totalorder %s23, 2
    %p88 = por %p86, %p87
    %p90 = scmp.ne.s32.totalorder %s75, %s89
    %p91 = scmp.eq.s32.totalorder %s23, 0
    %p92 = por %p90, %p91
    %s94 = sadd.s32 %s93, 1
    %p97 = scmp.eq.s32.totalorder %s17, 2
    %p98 = scmp.ne.s32.totalorder %s93, %s95
    %p99 = scmp.eq.s32.totalorder %s17, 0
    %p100 = por %p98, %p99
    %p101 = scmp.ne.s32.totalorder %s93, %s95
    %p102 = scmp.eq.s32.totalorder %s22, 2
    %p103 = por %p101, %p102
    %p104 = scmp.ne.s32.totalorder %s95, %s96
    %p105 = scmp.eq.s32.totalorder %s22, 0
    %p106 = por %p104, %p105
    %p107 = scmp.ne.s32.totalorder %s95, %s96
    %p108 = scmp.eq.s32.totalorder %s23, 2
    %p109 = por %p107, %p108
    %p111 = scmp.ne.s32.totalorder %s96, %s110
    %p112 = scmp.eq.s32.totalorder %s23, 0
    %p113 = por %p111, %p112
    %s115 = sadd.s32 %s114, 1
    %p118 = scmp.eq.s32.totalorder %s17, 2
    %p119 = scmp.ne.s32.totalorder %s114, %s116
    %p120 = scmp.eq.s32.totalorder %s17, 0
    %p121 = por %p119, %p120
    %p122 = scmp.ne.s32.totalorder %s114, %s116
    %p123 = scmp.eq.s32.totalorder %s22, 2
    %p124 = por %p122, %p123
    %p125 = scmp.ne.s32.totalorder %s116, %s117
    %p126 = scmp.eq.s32.totalorder %s22, 0
    %p127 = por %p125, %p126
    %p128 = scmp.ne.s32.totalorder %s116, %s117
    %p129 = scmp.eq.s32.totalorder %s23, 2
    %p130 = por %p128, %p129
    %p132 = scmp.ne.s32.totalorder %s117, %s131
    %p133 = scmp.eq.s32.totalorder %s23, 0
    %p134 = por %p132, %p133
    %s136 = sadd.s32 %s135, 1
    %p139 = scmp.eq.s32.totalorder %s17, 2
    %p140 = scmp.ne.s32.totalorder %s135, %s137
    %p141 = scmp.eq.s32.totalorder %s17, 0
    %p142 = por %p140, %p141
    %p143 = scmp.ne.s32.totalorder %s135, %s137
    %p144 = scmp.eq.s32.totalorder %s22, 2
    %p145 = por %p143, %p144
    %p146 = scmp.ne.s32.totalorder %s137, %s138
    %p147 = scmp.eq.s32.totalorder %s22, 0
    %p148 = por %p146, %p147
    %p149 = scmp.ne.s32.totalorder %s137, %s138
    %p150 = scmp.eq.s32.totalorder %s23, 2
    %p151 = por %p149, %p150
    %p153 = scmp.ne.s32.totalorder %s138, %s152
    %p154 = scmp.eq.s32.totalorder %s23, 0
    %p155 = por %p153, %p154
    %s157 = sadd.s32 %s156, 1
    %p160 = scmp.eq.s32.totalorder %s17, 2
    %p161 = scmp.ne.s32.totalorder %s156, %s158
    %p162 = scmp.eq.s32.totalorder %s17, 0
    %p163 = por %p161, %p162
    %p164 = scmp.ne.s32.totalorder %s156, %s158
    %p165 = scmp.eq.s32.totalorder %s22, 2
    %p166 = por %p164, %p165
    %p167 = scmp.ne.s32.totalorder %s158, %s159
    %p168 = scmp.eq.s32.totalorder %s22, 0
    %p169 = por %p167, %p168
    %p170 = scmp.ne.s32.totalorder %s158, %s159
    %p171 = scmp.eq.s32.totalorder %s23, 2
    %p172 = por %p170, %p171
    %p174 = scmp.ne.s32.totalorder %s159, %s173
    %p175 = scmp.eq.s32.totalorder %s23, 0
    %p176 = por %p174, %p175
    %s178 = sadd.s32 %s177, 1
    %p181 = scmp.eq.s32.totalorder %s17, 2
    %p182 = scmp.ne.s32.totalorder %s177, %s179
    %p183 = scmp.eq.s32.totalorder %s17, 0
    %p184 = por %p182, %p183
    %p185 = scmp.ne.s32.totalorder %s177, %s179
    %p186 = scmp.eq.s32.totalorder %s22, 2
    %p187 = por %p185, %p186
    %p188 = scmp.ne.s32.totalorder %s179, %s180
    %p189 = scmp.eq.s32.totalorder %s22, 0
    %p190 = por %p188, %p189
    %p191 = scmp.ne.s32.totalorder %s179, %s180
    %p192 = scmp.eq.s32.totalorder %s23, 2
    %p193 = por %p191, %p192
    %p195 = scmp.ne.s32.totalorder %s180, %s194
    %p196 = scmp.eq.s32.totalorder %s23, 0
    %p197 = por %p195, %p196
    %s199 = sadd.s32 %s198, 1
    %p202 = scmp.eq.s32.totalorder %s17, 2
    %p203 = scmp.ne.s32.totalorder %s198, %s200
    %p204 = scmp.eq.s32.totalorder %s17, 0
    %p205 = por %p203, %p204
    %p206 = scmp.ne.s32.totalorder %s198, %s200
    %p207 = scmp.eq.s32.totalorder %s22, 2
    %p208 = por %p206, %p207
    %p209 = scmp.ne.s32.totalorder %s200, %s201
    %p210 = scmp.eq.s32.totalorder %s22, 0
    %p211 = por %p209, %p210
    %p212 = scmp.ne.s32.totalorder %s200, %s201
    %p213 = scmp.eq.s32.totalorder %s23, 2
    %p214 = por %p212, %p213
    %p216 = scmp.ne.s32.totalorder %s201, %s215
    %p217 = scmp.eq.s32.totalorder %s23, 0
    %p218 = por %p216, %p217
    %s219 = ssub.s32 %s17, %s24
    %p220 = scmp.eq.s32.totalorder %s219, 0
    %s222 = sadd.s32 %s221, 1
    %s223 = scalar_select %p220, %s221, %s222
    %p226 = pneg %p220
    %p227 = scmp.eq.s32.totalorder %s17, 2
    %p228 = por %p226, %p227
    %p229 = scmp.ne.s32.totalorder %s221, %s224
    %p230 = scmp.eq.s32.totalorder %s17, 0
    %p231 = por %p229, %p230
    %p232 = scmp.ne.s32.totalorder %s221, %s224
    %p233 = scmp.eq.s32.totalorder %s22, 2
    %p234 = por %p232, %p233
    %p235 = scmp.ne.s32.totalorder %s224, %s225
    %p236 = scmp.eq.s32.totalorder %s22, 0
    %p237 = por %p235, %p236
    %p238 = scmp.ne.s32.totalorder %s224, %s225
    %p239 = scmp.eq.s32.totalorder %s23, 2
    %p240 = por %p238, %p239
    %p242 = scmp.ne.s32.totalorder %s225, %s241
    %p243 = scmp.eq.s32.totalorder %s23, 0
    %p244 = por %p242, %p243
    %p245 = scmp.le.s32.totalorder 1, %s17
    %p246 = scmp.lt.s32.totalorder %s17, 4
    %p247 = pnand %p245, %p246
    %p248 = pneg %p247
    // Predicated region
    $region9: #{mlp_forward.1} parent=5 // pred_check
      _
    $region10: #{mlp_forward.1} parent=5 // pred_check_branch
      %250 = sbr.rel (%p247) target = $region12
    $region11: #{mlp_forward.1} parent=5 // pred_region
      %s251 = ssub.s32 %s17, 1
      // Predicated region
      $region13: #{mlp_forward.1} parent=11 // pred_check
        %p252 = pneg %p64
      $region14: #{mlp_forward.1} parent=11 // pred_check_branch
        %254 = sbr.rel (%p252) target = $region16
      $region15: #{mlp_forward.1} parent=11 // pred_region
        _
      $region16: #{mlp_forward.1} parent=11 // pred_fallthru
        _
      // Predicated region
      $region17: #{mlp_forward.1} parent=11 // pred_check
        %p255 = pneg %p85
      $region18: #{mlp_forward.1} parent=11 // pred_check_branch
        %257 = sbr.rel (%p255) target = $region20
      $region19: #{mlp_forward.1} parent=11 // pred_region
        _
      $region20: #{mlp_forward.1} parent=11 // pred_fallthru
        _
      // Predicated region
      $region21: #{mlp_forward.1} parent=11 // pred_check
        %p258 = pneg %p106
      $region22: #{mlp_forward.1} parent=11 // pred_check_branch
        %260 = sbr.rel (%p258) target = $region24
      $region23: #{mlp_forward.1} parent=11 // pred_region
        _
      $region24: #{mlp_forward.1} parent=11 // pred_fallthru
        _
      // Predicated region
      $region25: #{mlp_forward.1} parent=11 // pred_check
        %p261 = pneg %p127
      $region26: #{mlp_forward.1} parent=11 // pred_check_branch
        %263 = sbr.rel (%p261) target = $region28
      $region27: #{mlp_forward.1} parent=11 // pred_region
        _
      $region28: #{mlp_forward.1} parent=11 // pred_fallthru
        _
      // Predicated region
      $region29: #{mlp_forward.1} parent=11 // pred_check
        %p264 = pneg %p148
      $region30: #{mlp_forward.1} parent=11 // pred_check_branch
        %266 = sbr.rel (%p264) target = $region32
      $region31: #{mlp_forward.1} parent=11 // pred_region
        _
      $region32: #{mlp_forward.1} parent=11 // pred_fallthru
        _
      // Predicated region
      $region33: #{mlp_forward.1} parent=11 // pred_check
        %p267 = pneg %p169
      $region34: #{mlp_forward.1} parent=11 // pred_check_branch
        %269 = sbr.rel (%p267) target = $region36
      $region35: #{mlp_forward.1} parent=11 // pred_region
        _
      $region36: #{mlp_forward.1} parent=11 // pred_fallthru
        _
      // Predicated region
      $region37: #{mlp_forward.1} parent=11 // pred_check
        %p270 = pneg %p190
      $region38: #{mlp_forward.1} parent=11 // pred_check_branch
        %272 = sbr.rel (%p270) target = $region40
      $region39: #{mlp_forward.1} parent=11 // pred_region
        _
      $region40: #{mlp_forward.1} parent=11 // pred_fallthru
        _
      // Predicated region
      $region41: #{mlp_forward.1} parent=11 // pred_check
        %p273 = pneg %p211
      $region42: #{mlp_forward.1} parent=11 // pred_check_branch
        %275 = sbr.rel (%p273) target = $region44
      $region43: #{mlp_forward.1} parent=11 // pred_region
        _
      $region44: #{mlp_forward.1} parent=11 // pred_fallthru
        _
    $region12: #{mlp_forward.1} parent=5 // pred_fallthru
      _
    %p276 = scmp.lt.s32.totalorder %s17, 3
    // Predicated region
    $region45: #{mlp_forward.1} parent=5 // pred_check
      %p277 = pneg %p276
    $region46: #{mlp_forward.1} parent=5 // pred_check_branch
      %279 = sbr.rel (%p277) target = $region48
    $region47: #{mlp_forward.1} parent=5 // pred_region
      // Predicated region
      $region49: #{mlp_forward.1} parent=47 // pred_check
        %p280 = pneg %p37
      $region50: #{mlp_forward.1} parent=47 // pred_check_branch
        %282 = sbr.rel (%p280) target = $region52
      $region51: #{mlp_forward.1} parent=47 // pred_region
        %p283 = scmp.lt.s32.totalorder %s17, 2
        %s284 = scalar_select %p283, %s17, 2
        %s285 = smul.addr %s284, 8
        %s286 = scalar_lea.vmem %s0, %s285
      $region52: #{mlp_forward.1} parent=47 // pred_fallthru
        _
    $region48: #{mlp_forward.1} parent=5 // pred_fallthru
      _
    %p287 = scmp.le.s32.totalorder 1, %s17
    %p288 = scmp.lt.s32.totalorder %s17, 4
    %p289 = pnand %p287, %p288
    %p290 = pneg %p289
    // Predicated region
    $region53: #{mlp_forward.1} parent=5 // pred_check
      _
    $region54: #{mlp_forward.1} parent=5 // pred_check_branch
      %292 = sbr.rel (%p289) target = $region56
    $region55: #{mlp_forward.1} parent=5 // pred_region
      %s293 = ssub.s32 %s17, 1
      %p294 = scmp.lt.s32.totalorder %s22, 2
      %s295 = scalar_select %p294, %s22, 2
      %s296 = smul.addr %s295, 8
      %s297 = scalar_lea.vmem %s0, %s296
      %p298 = pneg %p43
      %p299 = pneg %p40
      %p300 = pneg %p64
      %p301 = pneg %p61
      %p302 = pneg %p85
      %p303 = pneg %p82
      %p304 = pneg %p106
      %p305 = pneg %p103
      %p306 = pneg %p127
      %p307 = pneg %p124
      %p308 = pneg %p148
      %p309 = pneg %p145
      %p310 = pneg %p169
      %p311 = pneg %p166
      %p312 = pneg %p190
      %p313 = pneg %p187
      %p314 = pneg %p211
      %p315 = pneg %p208
      %p316 = pneg %p237
      %p317 = pneg %p234
      %p318 = scmp.lt.s32.totalorder %s22, 2
      %s319 = scalar_select %p318, %s22, 2
      %s320 = scalar_lea.vmem %s9, %s319
      %p321 = scmp.lt.s32.totalorder %s22, 2
      %s322 = scalar_select %p321, %s22, 2
      %s323 = smul.addr %s322, 8
      %s324 = scalar_lea.vmem %s0, %s323
      %p325 = scmp.lt.s32.totalorder %s22, 2
      %s326 = scalar_select %p325, %s22, 2
      %s327 = scalar_lea.vmem %s9, %s326
      %v328 = vld [vmem:[%s324] sm:$0xff]
      %v329 = vld [vmem:[%s1] sm:$0xff]
      %v330 = vld [vmem:[%s1 + $0x8] sm:$0xff]
      %v331 = vld [vmem:[%s1 + $0x10] sm:$0xff]
      %v332 = vld [vmem:[%s1 + $0x18] sm:$0xff]
      %v333 = vld [vmem:[%s1 + $0x20] sm:$0xff]
      %v334 = vld [vmem:[%s1 + $0x28] sm:$0xff]
      %v335 = vld [vmem:[%s1 + $0x30] sm:$0xff]
      %v336 = vld [vmem:[%s1 + $0x38] sm:$0xff]
      %v337 = vld [vmem:[%s2] sm:$0xff]
      %v338 = vld [vmem:[%s2 + $0x8] sm:$0xff]
      %v339 = vld [vmem:[%s2 + $0x10] sm:$0xff]
      %v340 = vld [vmem:[%s2 + $0x18] sm:$0xff]
      %v341 = vld [vmem:[%s2 + $0x20] sm:$0xff]
      %v342 = vld [vmem:[%s2 + $0x28] sm:$0xff]
      %v343 = vld [vmem:[%s2 + $0x30] sm:$0xff]
      %v344 = vld [vmem:[%s2 + $0x38] sm:$0xff]
      %346 = vset.pattern.permute.xlu0 0
      %347 = vperm.xlu0 %346, %v337
      %v348 = vpop.permute.xlu0 %347
      %351 = vset.pattern.permute.xlu0 0
      %352 = vperm.xlu0 %351, %v338
      %v353 = vpop.permute.xlu0 %352
      %356 = vset.pattern.permute.xlu0 0
      %357 = vperm.xlu0 %356, %v339
      %v358 = vpop.permute.xlu0 %357
      %361 = vset.pattern.permute.xlu0 0
      %362 = vperm.xlu0 %361, %v340
      %v363 = vpop.permute.xlu0 %362
      %366 = vset.pattern.permute.xlu0 0
      %367 = vperm.xlu0 %366, %v341
      %v368 = vpop.permute.xlu0 %367
      %371 = vset.pattern.permute.xlu0 0
      %372 = vperm.xlu0 %371, %v342
      %v373 = vpop.permute.xlu0 %372
      %376 = vset.pattern.permute.xlu0 0
      %377 = vperm.xlu0 %376, %v343
      %v378 = vpop.permute.xlu0 %377
      %381 = vset.pattern.permute.xlu0 0
      %382 = vperm.xlu0 %381, %v344
      %v383 = vpop.permute.xlu0 %382
      %vm385 = vcmask 64512
      %v387 = vsel %vm385, %v329, 0
      %v390 = vsel %vm385, %v330, 0
      %v393 = vsel %vm385, %v331, 0
      %v396 = vsel %vm385, %v332, 0
      %v399 = vsel %vm385, %v333, 0
      %v402 = vsel %vm385, %v334, 0
      %v405 = vsel %vm385, %v335, 0
      %v408 = vsel %vm385, %v336, 0
      %410 = vmatprep.subr.mxu0 0.0
      %411 = vmatpush1.msra.mxu0 %v328
      %412 = vmatprep.subr.mxu0 0.0
      %413 = vmatpush1.msra.mxu0 0.0
      %414 = vmatprep.subr.mxu0 0.0
      %415 = vmatpush1.msra.mxu0 0.0
      %416 = vmatprep.subr.mxu0 0.0
      %417 = vmatpush1.msra.mxu0 0.0
      %418 = vmatprep.subr.mxu0 0.0
      %419 = vmatpush1.msra.mxu0 0.0
      %420 = vmatprep.subr.mxu0 0.0
      %421 = vmatpush1.msra.mxu0 0.0
      %422 = vmatprep.subr.mxu0 0.0
      %423 = vmatpush1.msra.mxu0 0.0
      %424 = vmatprep.subr.mxu0 0.0
      %425 = vmatpush1.msra.mxu0 0.0
      %426 = vmatprep.subr.mxu0 0.0
      %427 = vmatpush1.msra.mxu0 0.0
      %428 = vmatprep.subr.mxu0 0.0
      %429 = vmatpush1.msra.mxu0 0.0
      %430 = vmatprep.subr.mxu0 0.0
      %431 = vmatpush1.msra.mxu0 0.0
      %432 = vmatprep.subr.mxu0 0.0
      %433 = vmatpush1.msra.mxu0 0.0
      %434 = vmatprep.subr.mxu0 0.0
      %435 = vmatpush1.msra.mxu0 0.0
      %436 = vmatprep.subr.mxu0 0.0
      %437 = vmatpush1.msra.mxu0 0.0
      %438 = vmatprep.subr.mxu0 0.0
      %439 = vmatpush1.msra.mxu0 0.0
      %440 = vmatprep.subr.mxu0 0.0
      %441 = vmatpush1.msra.mxu0 0.0
      %442 = vmatprep.subr.mxu0 0.0
      %443 = vmatpush1.msra.mxu0 0.0
      %444 = vmatprep.subr.mxu0 0.0
      %445 = vmatpush1.msra.mxu0 0.0
      %446 = vmatprep.subr.mxu0 0.0
      %447 = vmatpush1.msra.mxu0 0.0
      %448 = vmatprep.subr.mxu0 0.0
      %449 = vmatpush1.msra.mxu0 0.0
      %450 = vmatprep.subr.mxu0 0.0
      %451 = vmatpush1.msra.mxu0 0.0
      %452 = vmatprep.subr.mxu0 0.0
      %453 = vmatpush1.msra.mxu0 0.0
      %454 = vmatprep.subr.mxu0 0.0
      %455 = vmatpush1.msra.mxu0 0.0
      %456 = vmatprep.subr.mxu0 0.0
      %457 = vmatpush1.msra.mxu0 0.0
      %458 = vmatprep.subr.mxu0 0.0
      %459 = vmatpush1.msra.mxu0 0.0
      %460 = vmatprep.subr.mxu0 0.0
      %461 = vmatpush1.msra.mxu0 0.0
      %462 = vmatprep.subr.mxu0 0.0
      %463 = vmatpush1.msra.mxu0 0.0
      %464 = vmatprep.subr.mxu0 0.0
      %465 = vmatpush1.msra.mxu0 0.0
      %466 = vmatprep.subr.mxu0 0.0
      %467 = vmatpush1.msra.mxu0 0.0
      %468 = vmatprep.subr.mxu0 0.0
      %469 = vmatpush1.msra.mxu0 0.0
      %470 = vmatprep.subr.mxu0 0.0
      %471 = vmatpush1.msra.mxu0 0.0
      %472 = vmatprep.subr.mxu0 0.0
      %473 = vmatpush1.msra.mxu0 0.0
      %474 = vmatprep.mubr.f32.mxu0 0.0
      %475 = vmatmul.mubr.f32.gmra.mrb[0].mxu0 %v387
      %v476 = vpop.f32.mrb[0].mxu0
      %v477 = vadd.f32 %v348, %v476
      %v478 = vpop.f32.mrb[0].mxu0
      %479 = vmatprep.mubr.f32.mxu0 0.0
      %480 = vmatmul.mubr.f32.gmra.mrb[0].mxu0 %v390
      %v481 = vpop.f32.mrb[0].mxu0
      %v482 = vadd.f32 %v353, %v481
      %v483 = vpop.f32.mrb[0].mxu0
      %484 = vmatprep.mubr.f32.mxu0 0.0
      %485 = vmatmul.mubr.f32.gmra.mrb[0].mxu0 %v393
      %v486 = vpop.f32.mrb[0].mxu0
      %v487 = vadd.f32 %v358, %v486
      %v488 = vpop.f32.mrb[0].mxu0
      %489 = vmatprep.mubr.f32.mxu0 0.0
      %490 = vmatmul.mubr.f32.gmra.mrb[0].mxu0 %v396
      %v491 = vpop.f32.mrb[0].mxu0
      %v492 = vadd.f32 %v363, %v491
      %v493 = vpop.f32.mrb[0].mxu0
      %494 = vmatprep.mubr.f32.mxu0 0.0
      %495 = vmatmul.mubr.f32.gmra.mrb[0].mxu0 %v399
      %v496 = vpop.f32.mrb[0].mxu0
      %v497 = vadd.f32 %v368, %v496
      %v498 = vpop.f32.mrb[0].mxu0
      %499 = vmatprep.mubr.f32.mxu0 0.0
      %500 = vmatmul.mubr.f32.gmra.mrb[0].mxu0 %v402
      %v501 = vpop.f32.mrb[0].mxu0
      %v502 = vadd.f32 %v373, %v501
      %v503 = vpop.f32.mrb[0].mxu0
      %504 = vmatprep.mubr.f32.mxu0 0.0
      %505 = vmatmul.mubr.f32.gmra.mrb[0].mxu0 %v405
      %v506 = vpop.f32.mrb[0].mxu0
      %v507 = vadd.f32 %v378, %v506
      %v508 = vpop.f32.mrb[0].mxu0
      %509 = vmatprep.mubr.f32.mxu0 0.0
      %510 = vmatmul.mubr.f32.gmra.mrb[0].mxu0 %v408
      %v511 = vpop.f32.mrb[0].mxu0
      %v512 = vadd.f32 %v383, %v511
      %v513 = vpop.f32.mrb[0].mxu0
      %514 = vdwg.mxu0
      %v515 = vmax.f32 %v477, 0.0
      %v516 = vmax.f32 %v482, 0.0
      %v517 = vmax.f32 %v487, 0.0
      %v518 = vmax.f32 %v492, 0.0
      %v519 = vmax.f32 %v497, 0.0
      %v520 = vmax.f32 %v502, 0.0
      %v521 = vmax.f32 %v507, 0.0
      %v522 = vmax.f32 %v512, 0.0
      %v523 = vld [vmem:[%s3] sm:$0xff]
      %v524 = vld [vmem:[%s3 + $0x8] sm:$0xff]
      %v525 = vld [vmem:[%s3 + $0x10] sm:$0xff]
      %v526 = vld [vmem:[%s3 + $0x18] sm:$0xff]
      %v527 = vld [vmem:[%s4] sm:$0xff]
      %v528 = vld [vmem:[%s4 + $0x8] sm:$0xff]
      %v529 = vld [vmem:[%s4 + $0x10] sm:$0xff]
      %v530 = vld [vmem:[%s4 + $0x18] sm:$0xff]
      %532 = vset.pattern.permute.xlu0 0
      %533 = vperm.xlu0 %532, %v527
      %v534 = vpop.permute.xlu0 %533
      %537 = vset.pattern.permute.xlu0 0
      %538 = vperm.xlu0 %537, %v528
      %v539 = vpop.permute.xlu0 %538
      %542 = vset.pattern.permute.xlu0 0
      %543 = vperm.xlu0 %542, %v529
      %v544 = vpop.permute.xlu0 %543
      %547 = vset.pattern.permute.xlu0 0
      %548 = vperm.xlu0 %547, %v530
      %v549 = vpop.permute.xlu0 %548
      %vm551 = vcmask 523264
      %v553 = vsel %vm551, %v523, 0
      %v556 = vsel %vm551, %v524, 0
      %v559 = vsel %vm551, %v525, 0
      %v562 = vsel %vm551, %v526, 0
      %564 = vmatprep.subr.mxu0 0.0
      %565 = vmatpush1.msra.mxu0 %v515
      %566 = vmatprep.subr.mxu0 0.0
      %567 = vmatpush1.msra.mxu0 %v516
      %568 = vmatprep.subr.mxu0 0.0
      %569 = vmatpush1.msra.mxu0 %v517
      %570 = vmatprep.subr.mxu0 0.0
      %571 = vmatpush1.msra.mxu0 %v518
      %572 = vmatprep.subr.mxu0 0.0
      %573 = vmatpush1.msra.mxu0 %v519
      %574 = vmatprep.subr.mxu0 0.0
      %575 = vmatpush1.msra.mxu0 %v520
      %576 = vmatprep.subr.mxu0 0.0
      %577 = vmatpush1.msra.mxu0 %v521
      %578 = vmatprep.subr.mxu0 0.0
      %579 = vmatpush1.msra.mxu0 %v522
      %580 = vmatprep.subr.mxu0 0.0
      %581 = vmatpush1.msra.mxu0 0.0
      %582 = vmatprep.subr.mxu0 0.0
      %583 = vmatpush1.msra.mxu0 0.0
      %584 = vmatprep.subr.mxu0 0.0
      %585 = vmatpush1.msra.mxu0 0.0
      %586 = vmatprep.subr.mxu0 0.0
      %587 = vmatpush1.msra.mxu0 0.0
      %588 = vmatprep.subr.mxu0 0.0
      %589 = vmatpush1.msra.mxu0 0.0
      %590 = vmatprep.subr.mxu0 0.0
      %591 = vmatpush1.msra.mxu0 0.0
      %592 = vmatprep.subr.mxu0 0.0
      %593 = vmatpush1.msra.mxu0 0.0
      %594 = vmatprep.subr.mxu0 0.0
      %595 = vmatpush1.msra.mxu0 0.0
      %596 = vmatprep.subr.mxu0 0.0
      %597 = vmatpush1.msra.mxu0 0.0
      %598 = vmatprep.subr.mxu0 0.0
      %599 = vmatpush1.msra.mxu0 0.0
      %600 = vmatprep.subr.mxu0 0.0
      %601 = vmatpush1.msra.mxu0 0.0
      %602 = vmatprep.subr.mxu0 0.0
      %603 = vmatpush1.msra.mxu0 0.0
      %604 = vmatprep.subr.mxu0 0.0
      %605 = vmatpush1.msra.mxu0 0.0
      %606 = vmatprep.subr.mxu0 0.0
      %607 = vmatpush1.msra.mxu0 0.0
      %608 = vmatprep.subr.mxu0 0.0
      %609 = vmatpush1.msra.mxu0 0.0
      %610 = vmatprep.subr.mxu0 0.0
      %611 = vmatpush1.msra.mxu0 0.0
      %612 = vmatprep.subr.mxu0 0.0
      %613 = vmatpush1.msra.mxu0 0.0
      %614 = vmatprep.subr.mxu0 0.0
      %615 = vmatpush1.msra.mxu0 0.0
      %616 = vmatprep.subr.mxu0 0.0
      %617 = vmatpush1.msra.mxu0 0.0
      %618 = vmatprep.subr.mxu0 0.0
      %619 = vmatpush1.msra.mxu0 0.0
      %620 = vmatprep.subr.mxu0 0.0
      %621 = vmatpush1.msra.mxu0 0.0
      %622 = vmatprep.subr.mxu0 0.0
      %623 = vmatpush1.msra.mxu0 0.0
      %624 = vmatprep.subr.mxu0 0.0
      %625 = vmatpush1.msra.mxu0 0.0
      %626 = vmatprep.subr.mxu0 0.0
      %627 = vmatpush1.msra.mxu0 0.0
      %628 = vmatprep.mubr.f32.mxu0 0.0
      %629 = vmatmul.mubr.f32.gmra.mrb[0].mxu0 %v553
      %v630 = vpop.f32.mrb[0].mxu0
      %v631 = vadd.f32 %v534, %v630
      %v632 = vpop.f32.mrb[0].mxu0
      %633 = vmatprep.mubr.f32.mxu0 0.0
      %634 = vmatmul.mubr.f32.gmra.mrb[0].mxu0 %v556
      %v635 = vpop.f32.mrb[0].mxu0
      %v636 = vadd.f32 %v539, %v635
      %v637 = vpop.f32.mrb[0].mxu0
      %638 = vmatprep.mubr.f32.mxu0 0.0
      %639 = vmatmul.mubr.f32.gmra.mrb[0].mxu0 %v559
      %v640 = vpop.f32.mrb[0].mxu0
      %v641 = vadd.f32 %v544, %v640
      %v642 = vpop.f32.mrb[0].mxu0
      %643 = vmatprep.mubr.f32.mxu0 0.0
      %644 = vmatmul.mubr.f32.gmra.mrb[0].mxu0 %v562
      %v645 = vpop.f32.mrb[0].mxu0
      %v646 = vadd.f32 %v549, %v645
      %v647 = vpop.f32.mrb[0].mxu0
      %648 = vdwg.mxu0
      %v649 = vmax.f32 %v631, 0.0
      %v650 = vmax.f32 %v636, 0.0
      %v651 = vmax.f32 %v641, 0.0
      %v652 = vmax.f32 %v646, 0.0
      %v653 = vld [vmem:[%s5] sm:$0xff]
      %v654 = vld [vmem:[%s5 + $0x8] sm:$0xff]
      %v655 = vld [vmem:[%s6] sm:$0xff]
      %v656 = vld [vmem:[%s6 + $0x8] sm:$0xff]
      %658 = vset.pattern.permute.xlu0 0
      %659 = vperm.xlu0 %658, %v655
      %v660 = vpop.permute.xlu0 %659
      %663 = vset.pattern.permute.xlu0 0
      %664 = vperm.xlu0 %663, %v656
      %v665 = vpop.permute.xlu0 %664
      %vm667 = vcmask 261120
      %v669 = vsel %vm667, %v653, 0
      %v672 = vsel %vm667, %v654, 0
      %674 = vmatprep.subr.mxu0 0.0
      %675 = vmatpush1.msra.mxu0 %v649
      %676 = vmatprep.subr.mxu0 0.0
      %677 = vmatpush1.msra.mxu0 %v650
      %678 = vmatprep.subr.mxu0 0.0
      %679 = vmatpush1.msra.mxu0 %v651
      %680 = vmatprep.subr.mxu0 0.0
      %681 = vmatpush1.msra.mxu0 %v652
      %682 = vmatprep.subr.mxu0 0.0
      %683 = vmatpush1.msra.mxu0 0.0
      %684 = vmatprep.subr.mxu0 0.0
      %685 = vmatpush1.msra.mxu0 0.0
      %686 = vmatprep.subr.mxu0 0.0
      %687 = vmatpush1.msra.mxu0 0.0
      %688 = vmatprep.subr.mxu0 0.0
      %689 = vmatpush1.msra.mxu0 0.0
      %690 = vmatprep.subr.mxu0 0.0
      %691 = vmatpush1.msra.mxu0 0.0
      %692 = vmatprep.subr.mxu0 0.0
      %693 = vmatpush1.msra.mxu0 0.0
      %694 = vmatprep.subr.mxu0 0.0
      %695 = vmatpush1.msra.mxu0 0.0
      %696 = vmatprep.subr.mxu0 0.0
      %697 = vmatpush1.msra.mxu0 0.0
      %698 = vmatprep.subr.mxu0 0.0
      %699 = vmatpush1.msra.mxu0 0.0
      %700 = vmatprep.subr.mxu0 0.0
      %701 = vmatpush1.msra.mxu0 0.0
      %702 = vmatprep.subr.mxu0 0.0
      %703 = vmatpush1.msra.mxu0 0.0
      %704 = vmatprep.subr.mxu0 0.0
      %705 = vmatpush1.msra.mxu0 0.0
      %706 = vmatprep.subr.mxu0 0.0
      %707 = vmatpush1.msra.mxu0 0.0
      %708 = vmatprep.subr.mxu0 0.0
      %709 = vmatpush1.msra.mxu0 0.0
      %710 = vmatprep.subr.mxu0 0.0
      %711 = vmatpush1.msra.mxu0 0.0
      %712 = vmatprep.subr.mxu0 0.0
      %713 = vmatpush1.msra.mxu0 0.0
      %714 = vmatprep.subr.mxu0 0.0
      %715 = vmatpush1.msra.mxu0 0.0
      %716 = vmatprep.subr.mxu0 0.0
      %717 = vmatpush1.msra.mxu0 0.0
      %718 = vmatprep.subr.mxu0 0.0
      %719 = vmatpush1.msra.mxu0 0.0
      %720 = vmatprep.subr.mxu0 0.0
      %721 = vmatpush1.msra.mxu0 0.0
      %722 = vmatprep.subr.mxu0 0.0
      %723 = vmatpush1.msra.mxu0 0.0
      %724 = vmatprep.subr.mxu0 0.0
      %725 = vmatpush1.msra.mxu0 0.0
      %726 = vmatprep.subr.mxu0 0.0
      %727 = vmatpush1.msra.mxu0 0.0
      %728 = vmatprep.subr.mxu0 0.0
      %729 = vmatpush1.msra.mxu0 0.0
      %730 = vmatprep.subr.mxu0 0.0
      %731 = vmatpush1.msra.mxu0 0.0
      %732 = vmatprep.subr.mxu0 0.0
      %733 = vmatpush1.msra.mxu0 0.0
      %734 = vmatprep.subr.mxu0 0.0
      %735 = vmatpush1.msra.mxu0 0.0
      %736 = vmatprep.subr.mxu0 0.0
      %737 = vmatpush1.msra.mxu0 0.0
      %738 = vmatprep.mubr.f32.mxu0 0.0
      %739 = vmatmul.mubr.f32.gmra.mrb[0].mxu0 %v669
      %v740 = vpop.f32.mrb[0].mxu0
      %v741 = vadd.f32 %v660, %v740
      %v742 = vpop.f32.mrb[0].mxu0
      %743 = vmatprep.mubr.f32.mxu0 0.0
      %744 = vmatmul.mubr.f32.gmra.mrb[0].mxu0 %v672
      %v745 = vpop.f32.mrb[0].mxu0
      %v746 = vadd.f32 %v665, %v745
      %v747 = vpop.f32.mrb[0].mxu0
      %748 = vdwg.mxu0
      %v749 = vmax.f32 %v741, 0.0
      %v750 = vmax.f32 %v746, 0.0
      %v751 = vld [vmem:[%s7] sm:$0x1]
      %v752 = vld [vmem:[#allocation2] sm:$0x1]
      %754 = vset.pattern.permute.xlu0 0
      %755 = vperm.xlu0 %754, %v752
      %v756 = vpop.permute.xlu0 %755
      %v758 = vlaneseq
      %v759 = vshrl.u32 %v758, 7
      %v760 = vsub.s32 0, %v759
      %v761 = vrot.slane %v756, %v760
      %vm762 = vcmask 130048
      %v764 = vsel %vm762, %v751, 0
      %766 = vmatprep.subr.mxu0 0.0
      %767 = vmatpush1.msra.mxu0 %v749
      %768 = vmatprep.subr.mxu0 0.0
      %769 = vmatpush1.msra.mxu0 %v750
      %770 = vmatprep.subr.mxu0 0.0
      %771 = vmatpush1.msra.mxu0 0.0
      %772 = vmatprep.subr.mxu0 0.0
      %773 = vmatpush1.msra.mxu0 0.0
      %774 = vmatprep.subr.mxu0 0.0
      %775 = vmatpush1.msra.mxu0 0.0
      %776 = vmatprep.subr.mxu0 0.0
      %777 = vmatpush1.msra.mxu0 0.0
      %778 = vmatprep.subr.mxu0 0.0
      %779 = vmatpush1.msra.mxu0 0.0
      %780 = vmatprep.subr.mxu0 0.0
      %781 = vmatpush1.msra.mxu0 0.0
      %782 = vmatprep.subr.mxu0 0.0
      %783 = vmatpush1.msra.mxu0 0.0
      %784 = vmatprep.subr.mxu0 0.0
      %785 = vmatpush1.msra.mxu0 0.0
      %786 = vmatprep.subr.mxu0 0.0
      %787 = vmatpush1.msra.mxu0 0.0
      %788 = vmatprep.subr.mxu0 0.0
      %789 = vmatpush1.msra.mxu0 0.0
      %790 = vmatprep.subr.mxu0 0.0
      %791 = vmatpush1.msra.mxu0 0.0
      %792 = vmatprep.subr.mxu0 0.0
      %793 = vmatpush1.msra.mxu0 0.0
      %794 = vmatprep.subr.mxu0 0.0
      %795 = vmatpush1.msra.mxu0 0.0
      %796 = vmatprep.subr.mxu0 0.0
      %797 = vmatpush1.msra.mxu0 0.0
      %798 = vmatprep.subr.mxu0 0.0
      %799 = vmatpush1.msra.mxu0 0.0
      %800 = vmatprep.subr.mxu0 0.0
      %801 = vmatpush1.msra.mxu0 0.0
      %802 = vmatprep.subr.mxu0 0.0
      %803 = vmatpush1.msra.mxu0 0.0
      %804 = vmatprep.subr.mxu0 0.0
      %805 = vmatpush1.msra.mxu0 0.0
      %806 = vmatprep.subr.mxu0 0.0
      %807 = vmatpush1.msra.mxu0 0.0
      %808 = vmatprep.subr.mxu0 0.0
      %809 = vmatpush1.msra.mxu0 0.0
      %810 = vmatprep.subr.mxu0 0.0
      %811 = vmatpush1.msra.mxu0 0.0
      %812 = vmatprep.subr.mxu0 0.0
      %813 = vmatpush1.msra.mxu0 0.0
      %814 = vmatprep.subr.mxu0 0.0
      %815 = vmatpush1.msra.mxu0 0.0
      %816 = vmatprep.subr.mxu0 0.0
      %817 = vmatpush1.msra.mxu0 0.0
      %818 = vmatprep.subr.mxu0 0.0
      %819 = vmatpush1.msra.mxu0 0.0
      %820 = vmatprep.subr.mxu0 0.0
      %821 = vmatpush1.msra.mxu0 0.0
      %822 = vmatprep.subr.mxu0 0.0
      %823 = vmatpush1.msra.mxu0 0.0
      %824 = vmatprep.subr.mxu0 0.0
      %825 = vmatpush1.msra.mxu0 0.0
      %826 = vmatprep.subr.mxu0 0.0
      %827 = vmatpush1.msra.mxu0 0.0
      %828 = vmatprep.subr.mxu0 0.0
      %829 = vmatpush1.msra.mxu0 0.0
      %830 = vmatprep.mubr.f32.mxu0 0.0
      %831 = vmatmul.mubr.f32.gmra.mrb[0].mxu0 %v764
      %v832 = vpop.f32.mrb[0].mxu0
      %v833 = vadd.f32 %v761, %v832
      %v834 = vpop.f32.mrb[0].mxu0
      %835 = vdwg.mxu0
      %836 = vst [vmem:[%s327] sm:$0x1] %v833
      %p837 = scmp.lt.s32.totalorder %s22, 2
      %s838 = scalar_select %p837, %s22, 2
      %s839 = scalar_lea.vmem %s9, %s838
      // Predicated region
      $region57: #{mlp_forward.1} parent=55 // pred_check
        %p840 = pneg %p234
      $region58: #{mlp_forward.1} parent=55 // pred_check_branch
        %842 = sbr.rel (%p840) target = $region60
      $region59: #{mlp_forward.1} parent=55 // pred_region
        _
      $region60: #{mlp_forward.1} parent=55 // pred_fallthru
        _
    $region56: #{mlp_forward.1} parent=5 // pred_fallthru
      _
    %p843 = scmp.le.s32.totalorder 2, %s17
    // Predicated region
    $region61: #{mlp_forward.1} parent=5 // pred_check
      %p844 = pneg %p843
    $region62: #{mlp_forward.1} parent=5 // pred_check_branch
      %846 = sbr.rel (%p844) target = $region64
    $region63: #{mlp_forward.1} parent=5 // pred_region
      %s847 = ssub.s32 %s17, 2
      // Predicated region
      $region65: #{mlp_forward.1} parent=63 // pred_check
        %p848 = pneg %p240
      $region66: #{mlp_forward.1} parent=63 // pred_check_branch
        %850 = sbr.rel (%p848) target = $region68
      $region67: #{mlp_forward.1} parent=63 // pred_region
        %p851 = scmp.lt.s32.totalorder %s23, 2
        %s852 = scalar_select %p851, %s23, 2
        %s853 = scalar_lea.vmem %s9, %s852
      $region68: #{mlp_forward.1} parent=63 // pred_fallthru
        _
    $region64: #{mlp_forward.1} parent=5 // pred_fallthru
      _
  $region6: #{mlp_forward.1} parent=0 // loop_footer
    %s21 = sadd.s32 1, %s17
  $region7: #{mlp_forward.1} parent=0 // loop_footer_branch
    %16 = sbr.rel target = $region3
  $region8: #{mlp_forward.1} parent=0 // loop_exit
    _

</llo_original>
